<compile_context>
chip_gen: v5e
topology: v5e:2x2
jax: 0.10.0
libtpu: 0.0.40
codegen_flags: <defaults>
</compile_context>

<pallas_src>
import math
from functools import partial

import jax
import jax.numpy as jnp
from jax.experimental import pallas as pl
from jax.experimental.pallas import tpu as pltpu


NEG_SLOPE = 0.01  # nn.LeakyReLU() default


def _round_up(x, m):
    return ((x + m - 1) // m) * m


def _choose_tile(B, cap=2048, min_split=512):
    """Pick a batch tile (second-last block dim).

    - Small batches: one block with TB == B (block dim equal to the full array
      dim is always legal, regardless of divisibility by 8).
    - Large batches: at least 2 blocks (v7x megacore), tile a multiple of 8,
      capped so per-step VMEM stays tiny; edge block is masked by Pallas.
    """
    if B < min_split:
        return B
    n_blocks = max(2, pl.cdiv(B, cap))
    return min(cap, _round_up(pl.cdiv(B, n_blocks), 8))


# ----------------------------- Pallas kernel ------------------------------ #
def mlp_decoder_kernel(x_ref, w1_ref, b1_ref, w2_ref, b2_ref,
                       wl_ref, bl_ref, o_ref):
    """One batch-tile of the MLPDecoder forward (2 hidden layers + last_fc)."""
    neg = jnp.float32(NEG_SLOPE)

    h = x_ref[...]  # (TB, in) f32

    # hidden layer 0: Linear (bf16 MXU operands, f32 accum) + LeakyReLU (f32)
    h = jnp.dot(h.astype(jnp.bfloat16), w1_ref[...],
                preferred_element_type=jnp.float32) + b1_ref[...]
    h = jnp.maximum(h, neg * h)

    # hidden layer 1
    h = jnp.dot(h.astype(jnp.bfloat16), w2_ref[...],
                preferred_element_type=jnp.float32) + b2_ref[...]
    h = jnp.maximum(h, neg * h)

    # last_fc (Identity output activation); store only the real out_size lanes
    out = jnp.dot(h.astype(jnp.bfloat16), wl_ref[...],
                  preferred_element_type=jnp.float32) + bl_ref[...]
    o_ref[...] = out.astype(o_ref.dtype)


# ------------------------- one-time param packing -------------------------- #
def prepare_params(params):
    """Hoisted glue: transpose PyTorch-layout (out,in) weights to (in,out),
    cast matmul operands to bf16, reshape biases to (1,N). No lane padding."""
    w1, b1, w2, b2, wl, bl = params
    w1_t = w1.T.astype(jnp.bfloat16)            # (in, h1)
    w2_t = w2.T.astype(jnp.bfloat16)            # (h1, h2)
    wl_t = wl.T.astype(jnp.bfloat16)            # (h2, out)
    b1_r = b1.reshape(1, -1).astype(jnp.float32)
    b2_r = b2.reshape(1, -1).astype(jnp.float32)
    bl_r = bl.reshape(1, -1).astype(jnp.float32)
    return w1_t, b1_r, w2_t, b2_r, wl_t, bl_r


# ------------------------------- forward ----------------------------------- #
@jax.jit
def mlp_decoder_forward(x, w1_t, b1, w2_t, b2, wl_t, bl):
    B, in_size = x.shape
    h1 = w1_t.shape[1]
    h2 = w2_t.shape[1]
    out_size = wl_t.shape[1]

    TB = _choose_tile(B)
    n_blocks = pl.cdiv(B, TB)   # non-divisible grid: edge block masked by Pallas

    const = lambda shape: pl.BlockSpec(shape, lambda i: (0, 0))

    out = pl.pallas_call(
        mlp_decoder_kernel,
        out_shape=jax.ShapeDtypeStruct((B, out_size), jnp.float32),
        grid=(n_blocks,),
        in_specs=[
            pl.BlockSpec((TB, in_size), lambda i: (i, 0)),   # x: tiled over batch
            const((in_size, h1)), const((1, h1)),            # resident weights
            const((h1, h2)),      const((1, h2)),
            const((h2, out_size)), const((1, out_size)),
        ],
        out_specs=pl.BlockSpec((TB, out_size), lambda i: (i, 0)),
        compiler_params=pltpu.CompilerParams(
            dimension_semantics=("parallel",),      # megacore split on v7x
            vmem_limit_bytes=32 * 1024 * 1024,      # safe for v5e/v6e/v7x (~1 MiB used)
        ),
    )(x, w1_t, b1, w2_t, b2, wl_t, bl)

    return out


# --------------------------- parameter creation ---------------------------- #
def init_params(key, input_size, hidden_sizes, output_size,
                init_w=0.003, b_init_value=0.1):
    """Deterministic init mirroring MLPDecoder.__init__ (PyTorch (out,in) layout).

    fanin_init on a 2D Linear weight (shape (out, in)) uses size[0]=out as
    fan_in (quirk of the reference code) -> bound = 1/sqrt(out_features).
    Hidden biases filled with 0.1; last_fc weight & bias ~ U(-0.003, 0.003).
    """
    params = []
    in_size = input_size
    keys = jax.random.split(key, len(hidden_sizes) + 2)
    for i, next_size in enumerate(hidden_sizes):
        bound = 1.0 / math.sqrt(next_size)          # size[0] of (out, in)
        w = jax.random.uniform(keys[i], (next_size, in_size),
                               minval=-bound, maxval=bound, dtype=jnp.float32)
        b = jnp.full((next_size,), b_init_value, dtype=jnp.float32)
        params.extend([w, b])
        in_size = next_size
    wl = jax.random.uniform(keys[-2], (output_size, in_size),
                            minval=-init_w, maxval=init_w, dtype=jnp.float32)
    bl = jax.random.uniform(keys[-1], (output_size,),
                            minval=-init_w, maxval=init_w, dtype=jnp.float32)
    params.extend([wl, bl])
    return tuple(params)


# -------------------------------- references ------------------------------- #
def reference_forward_f32(x, params):
    w1, b1, w2, b2, wl, bl = params
    lrelu = lambda v: jnp.where(v > 0, v, NEG_SLOPE * v)
    h = lrelu(x @ w1.T + b1)
    h = lrelu(h @ w2.T + b2)
    return h @ wl.T + bl


def reference_forward_bf16(x, params):
    """Same math as the kernel: bf16 matmul operands, f32 accumulation."""
    w1, b1, w2, b2, wl, bl = params
    mm = lambda a, w: jnp.dot(a.astype(jnp.bfloat16), w.T.astype(jnp.bfloat16),
                              preferred_element_type=jnp.float32)
    lrelu = lambda v: jnp.maximum(v, NEG_SLOPE * v)
    h = lrelu(mm(x, w1) + b1)
    h = lrelu(mm(h, w2) + b2)
    return mm(h, wl) + bl


if __name__ == "__main__":
    input_size = 32
    hidden_sizes = (64, 64)
    output_size = 16

    key = jax.random.PRNGKey(0)
    k_x, k_p, k_x2, k_x3 = jax.random.split(key, 4)
    params = init_params(k_p, input_size, hidden_sizes, output_size)
    prep = prepare_params(params)   # one-time: transposes/casts hoisted

    # small demo batch (single block, TB == B)
    x = jax.random.normal(k_x, (8, input_size), dtype=jnp.float32)
    out = jax.block_until_ready(mlp_decoder_forward(x, *prep))
    assert out.shape == (8, output_size)
    ref_bf16 = reference_forward_bf16(x, params)
    ref_f32 = reference_forward_f32(x, params)
    assert jnp.allclose(out, ref_bf16, atol=1e-3, rtol=1e-2), "mismatch vs bf16 reference"
    assert jnp.allclose(out, ref_f32, atol=5e-3, rtol=5e-2), "mismatch vs f32 reference"

    # tiny batch not a multiple of 8 (block dim == full array dim -> legal)
    x3 = jax.random.normal(k_x3, (2, input_size), dtype=jnp.float32)
    out3 = jax.block_until_ready(mlp_decoder_forward(x3, *prep))
    assert out3.shape == (2, output_size)
    assert jnp.allclose(out3, reference_forward_bf16(x3, params), atol=1e-3, rtol=1e-2), \
        "mismatch vs reference (B=2)"

    # larger batch -> >=2 grid blocks (megacore) + masked edge block, no padding pass
    x2 = jax.random.normal(k_x2, (600, input_size), dtype=jnp.float32)
    out2 = jax.block_until_ready(mlp_decoder_forward(x2, *prep))
    assert out2.shape == (600, output_size)
    ref2 = reference_forward_bf16(x2, params)
    assert jnp.allclose(out2, ref2, atol=1e-3, rtol=1e-2), "mismatch vs reference (B=600)"

    print("KERNEL_OK")
</pallas_src>

<mosaic_0001>
module attributes {stable_mosaic.version = 11 : i64} {
  func.func @mlp_decoder_kernel(%arg0: i32, %arg1: memref<8x32xf32, #tpu.memory_space<vmem>>, %arg2: memref<32x64xbf16, #tpu.memory_space<vmem>>, %arg3: memref<1x64xf32, #tpu.memory_space<vmem>>, %arg4: memref<64x64xbf16, #tpu.memory_space<vmem>>, %arg5: memref<1x64xf32, #tpu.memory_space<vmem>>, %arg6: memref<64x16xbf16, #tpu.memory_space<vmem>>, %arg7: memref<1x16xf32, #tpu.memory_space<vmem>>, %arg8: memref<8x16xf32, #tpu.memory_space<vmem>>) attributes {dimension_semantics = [#tpu.dimension_semantics<parallel>], iteration_bounds = array<i64: 1>, scalar_prefetch = 0 : i64, scratch_operands = 0 : i64, tpu.core_type = #tpu.core_type<tc>, window_params = [{transform_indices = @transform_0, window_bounds = array<i64: 8, 32>}, {pipeline_mode = #tpu.pipeline_mode<synchronous>, transform_indices = @transform_1, window_bounds = array<i64: 32, 64>}, {pipeline_mode = #tpu.pipeline_mode<synchronous>, transform_indices = @transform_2, window_bounds = array<i64: 1, 64>}, {pipeline_mode = #tpu.pipeline_mode<synchronous>, transform_indices = @transform_3, window_bounds = array<i64: 64, 64>}, {pipeline_mode = #tpu.pipeline_mode<synchronous>, transform_indices = @transform_4, window_bounds = array<i64: 1, 64>}, {pipeline_mode = #tpu.pipeline_mode<synchronous>, transform_indices = @transform_5, window_bounds = array<i64: 64, 16>}, {pipeline_mode = #tpu.pipeline_mode<synchronous>, transform_indices = @transform_6, window_bounds = array<i64: 1, 16>}, {transform_indices = @transform_7, window_bounds = array<i64: 8, 16>}]} {
    %c0 = arith.constant 0 : index
    %c0_0 = arith.constant 0 : index
    %0 = vector.load %arg1[%c0, %c0_0] : memref<8x32xf32, #tpu.memory_space<vmem>>, vector<8x32xf32>
    %1 = arith.truncf %0 : vector<8x32xf32> to vector<8x32xbf16>
    %c0_1 = arith.constant 0 : index
    %c0_2 = arith.constant 0 : index
    %2 = vector.load %arg2[%c0_1, %c0_2] : memref<32x64xbf16, #tpu.memory_space<vmem>>, vector<32x64xbf16>
    %cst = arith.constant dense<0.000000e+00> : vector<8x64xf32>
    %3 = tpu.matmul %1, %2, %cst {dimension_numbers = #tpu.dot_dimension_numbers<[1], [0], [0], [1], [0, 0, 1, 1], [], []>} : vector<8x32xbf16>, vector<32x64xbf16>, vector<8x64xf32> -> vector<8x64xf32>
    %c0_3 = arith.constant 0 : index
    %c0_4 = arith.constant 0 : index
    %4 = vector.load %arg3[%c0_3, %c0_4] : memref<1x64xf32, #tpu.memory_space<vmem>>, vector<1x64xf32>
    %5 = vector.broadcast %4 : vector<1x64xf32> to vector<8x64xf32>
    %6 = arith.addf %3, %5 : vector<8x64xf32>
    %cst_5 = arith.constant 0.00999999977 : f32
    %7 = vector.broadcast %cst_5 : f32 to vector<8x64xf32>
    %8 = arith.mulf %7, %6 : vector<8x64xf32>
    %9 = arith.maximumf %6, %8 : vector<8x64xf32>
    %10 = arith.truncf %9 : vector<8x64xf32> to vector<8x64xbf16>
    %c0_6 = arith.constant 0 : index
    %c0_7 = arith.constant 0 : index
    %11 = vector.load %arg4[%c0_6, %c0_7] : memref<64x64xbf16, #tpu.memory_space<vmem>>, vector<64x64xbf16>
    %cst_8 = arith.constant dense<0.000000e+00> : vector<8x64xf32>
    %12 = tpu.matmul %10, %11, %cst_8 {dimension_numbers = #tpu.dot_dimension_numbers<[1], [0], [0], [1], [0, 0, 1, 1], [], []>} : vector<8x64xbf16>, vector<64x64xbf16>, vector<8x64xf32> -> vector<8x64xf32>
    %c0_9 = arith.constant 0 : index
    %c0_10 = arith.constant 0 : index
    %13 = vector.load %arg5[%c0_9, %c0_10] : memref<1x64xf32, #tpu.memory_space<vmem>>, vector<1x64xf32>
    %14 = vector.broadcast %13 : vector<1x64xf32> to vector<8x64xf32>
    %15 = arith.addf %12, %14 : vector<8x64xf32>
    %cst_11 = arith.constant 0.00999999977 : f32
    %16 = vector.broadcast %cst_11 : f32 to vector<8x64xf32>
    %17 = arith.mulf %16, %15 : vector<8x64xf32>
    %18 = arith.maximumf %15, %17 : vector<8x64xf32>
    %19 = arith.truncf %18 : vector<8x64xf32> to vector<8x64xbf16>
    %c0_12 = arith.constant 0 : index
    %c0_13 = arith.constant 0 : index
    %20 = vector.load %arg6[%c0_12, %c0_13] : memref<64x16xbf16, #tpu.memory_space<vmem>>, vector<64x16xbf16>
    %cst_14 = arith.constant dense<0.000000e+00> : vector<8x16xf32>
    %21 = tpu.matmul %19, %20, %cst_14 {dimension_numbers = #tpu.dot_dimension_numbers<[1], [0], [0], [1], [0, 0, 1, 1], [], []>} : vector<8x64xbf16>, vector<64x16xbf16>, vector<8x16xf32> -> vector<8x16xf32>
    %c0_15 = arith.constant 0 : index
    %c0_16 = arith.constant 0 : index
    %22 = vector.load %arg7[%c0_15, %c0_16] : memref<1x16xf32, #tpu.memory_space<vmem>>, vector<1x16xf32>
    %23 = vector.broadcast %22 : vector<1x16xf32> to vector<8x16xf32>
    %24 = arith.addf %21, %23 : vector<8x16xf32>
    %c0_17 = arith.constant 0 : index
    %c0_18 = arith.constant 0 : index
    %25 = vector.load %arg8[%c0_17, %c0_18] : memref<8x16xf32, #tpu.memory_space<vmem>>, vector<8x16xf32>
    tpu.vector_store %arg8[%c0_17, %c0_18], %24 {strides = array<i32>} : memref<8x16xf32, #tpu.memory_space<vmem>>, vector<8x16xf32>,
    return
  }
  func.func @transform_0(%arg0: i32) -> (i32, i32) {
    %c0_i32 = arith.constant 0 : i32
    %c0_i32_0 = arith.constant 0 : i32
    return %arg0, %c0_i32 : i32, i32
  }
  func.func @transform_1(%arg0: i32) -> (i32, i32) {
    %c0_i32 = arith.constant 0 : i32
    %c0_i32_0 = arith.constant 0 : i32
    %c0_i32_1 = arith.constant 0 : i32
    return %c0_i32, %c0_i32_0 : i32, i32
  }
  func.func @transform_2(%arg0: i32) -> (i32, i32) {
    %c0_i32 = arith.constant 0 : i32
    %c0_i32_0 = arith.constant 0 : i32
    %c0_i32_1 = arith.constant 0 : i32
    return %c0_i32, %c0_i32_0 : i32, i32
  }
  func.func @transform_3(%arg0: i32) -> (i32, i32) {
    %c0_i32 = arith.constant 0 : i32
    %c0_i32_0 = arith.constant 0 : i32
    %c0_i32_1 = arith.constant 0 : i32
    return %c0_i32, %c0_i32_0 : i32, i32
  }
  func.func @transform_4(%arg0: i32) -> (i32, i32) {
    %c0_i32 = arith.constant 0 : i32
    %c0_i32_0 = arith.constant 0 : i32
    %c0_i32_1 = arith.constant 0 : i32
    return %c0_i32, %c0_i32_0 : i32, i32
  }
  func.func @transform_5(%arg0: i32) -> (i32, i32) {
    %c0_i32 = arith.constant 0 : i32
    %c0_i32_0 = arith.constant 0 : i32
    %c0_i32_1 = arith.constant 0 : i32
    return %c0_i32, %c0_i32_0 : i32, i32
  }
  func.func @transform_6(%arg0: i32) -> (i32, i32) {
    %c0_i32 = arith.constant 0 : i32
    %c0_i32_0 = arith.constant 0 : i32
    %c0_i32_1 = arith.constant 0 : i32
    return %c0_i32, %c0_i32_0 : i32, i32
  }
  func.func @transform_7(%arg0: i32) -> (i32, i32) {
    %c0_i32 = arith.constant 0 : i32
    %c0_i32_0 = arith.constant 0 : i32
    return %arg0, %c0_i32 : i32, i32
  }
}

</mosaic_0001>

<llo_original>
// kernel: mlp_decoder_forward.1
$region0: #{mlp_decoder_forward.1}
  #allocation0 [shape = 'u32[]', space=smem, size = 0x4, offset = 0x4, fixed_abs, tag = 'smem constant byte address 0x4 - core index']
  #allocation1 [shape = 'u32[72,128]{1,0:T(1,128)}', space=vmem, size = 0x9000, scoped, tag = 'internal scratch']
  %s0 = inlined_call_operand.vmem [shape: f32[8,32], index: 0, kind: input, shape index: {}]
  %s1 = inlined_call_operand.hbm [shape: bf16[32,64], index: 1, kind: input, shape index: {}]
  %s2 = inlined_call_operand.vmem [shape: f32[1,64], index: 2, kind: input, shape index: {}]
  %s3 = inlined_call_operand.vmem [shape: bf16[64,64], index: 3, kind: input, shape index: {}]
  %s4 = inlined_call_operand.vmem [shape: f32[1,64], index: 4, kind: input, shape index: {}]
  %s5 = inlined_call_operand.vmem [shape: bf16[64,16], index: 5, kind: input, shape index: {}]
  %s6 = inlined_call_operand.vmem [shape: f32[1,16], index: 6, kind: input, shape index: {}]
  %s7 = inlined_call_operand.hbm [shape: f32[8,16], index: 7, kind: output, shape index: {}]
  %s8 = sld [smem:[#allocation0]]
  $region42: #{mlp_decoder_forward.1} parent=0
    _
  %s10 = ssub.s32 1, %s8
  %s11 = scalar_select 0, %s10, %s8
  $region1: #{mlp_decoder_forward.1} parent=0
    #allocation2 [shape = 'u8[8192]{0}', space=vmem, size = 0x2000, scoped, tag = 'input window, operand 1, single buffered']
    #allocation3 [shape = 's32[1]{0}', space=sflag, size = 0x4, scoped, tag = 'scoped memory for mlp_decoder_forward.1']
    #allocation4 [shape = 's32[1]{0}', space=sflag, size = 0x4, scoped, tag = 'scoped memory for mlp_decoder_forward.1']
    #allocation5 [shape = 'u8[4096]{0}', space=vmem, size = 0x1000, scoped, tag = 'output window, operand 0, single buffered']
    %12 = vsyncpa [#allocation3], 0
    %13 = vsyncpa [#allocation4], 0
    // Predicated region
    $region2: #{mlp_decoder_forward.1} parent=1 // pred_check
      _
    $region3: #{mlp_decoder_forward.1} parent=1 // pred_check_branch
      %15 = sbr.rel (0) target = $region5
    $region4: #{mlp_decoder_forward.1} parent=1 // pred_region
      _
    $region5: #{mlp_decoder_forward.1} parent=1 // pred_fallthru
      _
    // Predicated region
    $region6: #{mlp_decoder_forward.1} parent=1 // pred_check
      _
    $region7: #{mlp_decoder_forward.1} parent=1 // pred_check_branch
      %17 = sbr.rel (0) target = $region9
    $region8: #{mlp_decoder_forward.1} parent=1 // pred_region
      %19 = vsyncadd [#allocation3], 0
      %s20 = sshll.u32 %s1, 4
      %s21 = int_to_ptr.hbm [resolvable:$true] %s20
      %s22 = sshll.u32 [#allocation2], 4
      %s23 = int_to_ptr.vmem [resolvable:$true] %s22
      %28 = dma.hbm_to_vmem [thread:$0]  %s21, 256, %s23, [#allocation3], 64, 64, 4
    $region9: #{mlp_decoder_forward.1} parent=1 // pred_fallthru
      _
    // Predicated region
    $region10: #{mlp_decoder_forward.1} parent=1 // pred_check
      _
    $region11: #{mlp_decoder_forward.1} parent=1 // pred_check_branch
      %30 = sbr.rel (0) target = $region13
    $region12: #{mlp_decoder_forward.1} parent=1 // pred_region
      _
    $region13: #{mlp_decoder_forward.1} parent=1 // pred_fallthru
      _
    // Predicated region
    $region14: #{mlp_decoder_forward.1} parent=1 // pred_check
      _
    $region15: #{mlp_decoder_forward.1} parent=1 // pred_check_branch
      %32 = sbr.rel (0) target = $region17
    $region16: #{mlp_decoder_forward.1} parent=1 // pred_region
      _
    $region17: #{mlp_decoder_forward.1} parent=1 // pred_fallthru
      _
    // Predicated region
    $region18: #{mlp_decoder_forward.1} parent=1 // pred_check
      _
    $region19: #{mlp_decoder_forward.1} parent=1 // pred_check_branch
      %34 = sbr.rel (0) target = $region21
    $region20: #{mlp_decoder_forward.1} parent=1 // pred_region
      _
    $region21: #{mlp_decoder_forward.1} parent=1 // pred_fallthru
      _
    // Predicated region
    $region22: #{mlp_decoder_forward.1} parent=1 // pred_check
      _
    $region23: #{mlp_decoder_forward.1} parent=1 // pred_check_branch
      %36 = sbr.rel (0) target = $region25
    $region24: #{mlp_decoder_forward.1} parent=1 // pred_region
      _
    $region25: #{mlp_decoder_forward.1} parent=1 // pred_fallthru
      _
    // Predicated region
    $region26: #{mlp_decoder_forward.1} parent=1 // pred_check
      _
    $region27: #{mlp_decoder_forward.1} parent=1 // pred_check_branch
      %38 = sbr.rel (0) target = $region29
    $region28: #{mlp_decoder_forward.1} parent=1 // pred_region
      _
    $region29: #{mlp_decoder_forward.1} parent=1 // pred_fallthru
      _
    // Predicated region
    $region30: #{mlp_decoder_forward.1} parent=1 // pred_check
      _
    $region31: #{mlp_decoder_forward.1} parent=1 // pred_check_branch
      %40 = sbr.rel (0) target = $region33
    $region32: #{mlp_decoder_forward.1} parent=1 // pred_region
      %42 = dma.done [#allocation3], 256
    $region33: #{mlp_decoder_forward.1} parent=1 // pred_fallthru
      _
    %v44 = vld [vmem:[%s0] sm:$0xff]
    %v45 = vpack.c.bf16 %v44, %v44
    %v46 = vld [vmem:[#allocation2] sm:$0xf]
    %v47 = vld [vmem:[#allocation2 + $0x4] sm:$0xf]
    %v48 = vld [vmem:[#allocation2 + $0x8] sm:$0xf]
    %v49 = vld [vmem:[#allocation2 + $0xc] sm:$0xf]
    %v50 = vld [vmem:[%s2] sm:$0x1]
    %v52 = vperm.slane %v50, 0
    %v58 = vunpack.c.l.b16 %v46
    %v59 = vunpack.c.l.b16 %v47
    %v60 = vunpack.c.l.b16 %v48
    %v61 = vunpack.c.l.b16 %v49
    %v62 = vpack.c.b16 %v59, %v58
    %v63 = vpack.c.b16 %v61, %v60
    %vm66 = vcmask 261120
    %v68 = vsel %vm66, %v45, 0
    %70 = vmatpush.bf16.msra.mxu0 0
    %71 = vmatpush.bf16.msra.mxu0 0
    %72 = vmatpush.bf16.msra.mxu0 0
    %73 = vmatpush.bf16.msra.mxu0 0
    %74 = vmatpush.bf16.msra.mxu0 0
    %75 = vmatpush.bf16.msra.mxu0 0
    %76 = vmatpush.bf16.msra.mxu0 %v63
    %77 = vmatpush.bf16.msra.mxu0 %v62
    %78 = vmatmul.bf16.gmra.mxu0 %v68
    %v79 = vpop.f32.mrf.mxu0
    %v80 = vadd.f32 %v52, %v79
    %v81 = vpop.f32.mrf.mxu0
    %82 = vdwg.mxu0
    %v83 = vmul.f32 %v80, 0.01
    %v84 = vmax.f32 %v80, %v83
    %v85 = vpack.c.bf16 %v84, %v84
    %v86 = vld [vmem:[%s3] sm:$0xf]
    %v87 = vld [vmem:[%s3 + $0x4] sm:$0xf]
    %v88 = vld [vmem:[%s3 + $0x8] sm:$0xf]
    %v89 = vld [vmem:[%s3 + $0xc] sm:$0xf]
    %v90 = vld [vmem:[%s3 + $0x10] sm:$0xf]
    %v91 = vld [vmem:[%s3 + $0x14] sm:$0xf]
    %v92 = vld [vmem:[%s3 + $0x18] sm:$0xf]
    %v93 = vld [vmem:[%s3 + $0x1c] sm:$0xf]
    %v94 = vld [vmem:[%s4] sm:$0x1]
    %v96 = vperm.slane %v94, 0
    %v106 = vunpack.c.l.b16 %v86
    %v107 = vunpack.c.l.b16 %v87
    %v108 = vunpack.c.l.b16 %v88
    %v109 = vunpack.c.l.b16 %v89
    %v110 = vunpack.c.l.b16 %v90
    %v111 = vunpack.c.l.b16 %v91
    %v112 = vunpack.c.l.b16 %v92
    %v113 = vunpack.c.l.b16 %v93
    %v114 = vpack.c.b16 %v107, %v106
    %v115 = vpack.c.b16 %v109, %v108
    %v116 = vpack.c.b16 %v111, %v110
    %v117 = vpack.c.b16 %v113, %v112
    %vm122 = vcmask 523264
    %v124 = vsel %vm122, %v85, 0
    %126 = vmatpush.bf16.msra.mxu0 0
    %127 = vmatpush.bf16.msra.mxu0 0
    %128 = vmatpush.bf16.msra.mxu0 0
    %129 = vmatpush.bf16.msra.mxu0 0
    %130 = vmatpush.bf16.msra.mxu0 %v117
    %131 = vmatpush.bf16.msra.mxu0 %v116
    %132 = vmatpush.bf16.msra.mxu0 %v115
    %133 = vmatpush.bf16.msra.mxu0 %v114
    %134 = vmatmul.bf16.gmra.mxu0 %v124
    %v135 = vpop.f32.mrf.mxu0
    %v136 = vadd.f32 %v96, %v135
    %v137 = vpop.f32.mrf.mxu0
    %138 = vdwg.mxu0
    %v139 = vmul.f32 %v136, 0.01
    %v140 = vmax.f32 %v136, %v139
    %v141 = vpack.c.bf16 %v140, %v140
    %v142 = vld [vmem:[%s5] sm:$0xf]
    %v143 = vld [vmem:[%s5 + $0x4] sm:$0xf]
    %v144 = vld [vmem:[%s5 + $0x8] sm:$0xf]
    %v145 = vld [vmem:[%s5 + $0xc] sm:$0xf]
    %v146 = vld [vmem:[%s5 + $0x10] sm:$0xf]
    %v147 = vld [vmem:[%s5 + $0x14] sm:$0xf]
    %v148 = vld [vmem:[%s5 + $0x18] sm:$0xf]
    %v149 = vld [vmem:[%s5 + $0x1c] sm:$0xf]
    %v150 = vld [vmem:[%s6] sm:$0x1]
    %v152 = vperm.slane %v150, 0
    %v162 = vunpack.c.l.b16 %v142
    %v163 = vunpack.c.l.b16 %v143
    %v164 = vunpack.c.l.b16 %v144
    %v165 = vunpack.c.l.b16 %v145
    %v166 = vunpack.c.l.b16 %v146
    %v167 = vunpack.c.l.b16 %v147
    %v168 = vunpack.c.l.b16 %v148
    %v169 = vunpack.c.l.b16 %v149
    %v170 = vpack.c.b16 %v163, %v162
    %v171 = vpack.c.b16 %v165, %v164
    %v172 = vpack.c.b16 %v167, %v166
    %v173 = vpack.c.b16 %v169, %v168
    %v179 = vsel %vm122, %v141, 0
    %181 = vmatpush.bf16.msra.mxu0 0
    %182 = vmatpush.bf16.msra.mxu0 0
    %183 = vmatpush.bf16.msra.mxu0 0
    %184 = vmatpush.bf16.msra.mxu0 0
    %185 = vmatpush.bf16.msra.mxu0 %v173
    %186 = vmatpush.bf16.msra.mxu0 %v172
    %187 = vmatpush.bf16.msra.mxu0 %v171
    %188 = vmatpush.bf16.msra.mxu0 %v170
    %189 = vmatmul.bf16.gmra.mxu0 %v179
    %v190 = vpop.f32.mrf.mxu0
    %v191 = vadd.f32 %v152, %v190
    %v192 = vpop.f32.mrf.mxu0
    %193 = vdwg.mxu0
    %vm194 = vcmask 130048
    %195 = vst.msk [vmem:[#allocation5] sm:$0xff] %vm194, %v191
    // Predicated region
    $region34: #{mlp_decoder_forward.1} parent=1 // pred_check
      _
    $region35: #{mlp_decoder_forward.1} parent=1 // pred_check_branch
      %197 = sbr.rel (0) target = $region37
    $region36: #{mlp_decoder_forward.1} parent=1 // pred_region
      %199 = vsyncadd [#allocation4], 0
      %s201 = sshll.u32 [#allocation5], 4
      %s202 = int_to_ptr.vmem [resolvable:$true] %s201
      %s203 = sshll.u32 %s7, 4
      %s204 = int_to_ptr.hbm [resolvable:$true] %s203
      %206 = dma.vmem_to_hbm [thread:$0]  %s202, 128, %s204, [#allocation4]
    $region37: #{mlp_decoder_forward.1} parent=1 // pred_fallthru
      _
    // Predicated region
    $region38: #{mlp_decoder_forward.1} parent=1 // pred_check
      _
    $region39: #{mlp_decoder_forward.1} parent=1 // pred_check_branch
      %208 = sbr.rel (0) target = $region41
    $region40: #{mlp_decoder_forward.1} parent=1 // pred_region
      %210 = dma.done [#allocation4], 128
    $region41: #{mlp_decoder_forward.1} parent=1 // pred_fallthru
      _
    %211 = vsyncpa [#allocation3], 1
    %212 = vsyncpa [#allocation4], 1

</llo_original>
